<compile_context>
chip_gen: v7x
topology: tpu7x:2x2x1
jax: 0.10.0
libtpu: 0.0.40
codegen_flags: <defaults>
</compile_context>

<pallas_src>
import functools

import jax
import jax.numpy as jnp
from jax.experimental import pallas as pl
from jax.experimental.pallas import tpu as pltpu

LANE = 128      # TPU lane width (last dim)
SUBLANE = 8     # TPU sublane width (second-to-last dim), f32


def _round_up(n, m):
    return (n + m - 1) // m * m


def mlp_kernel(x_ref, w1t_ref, b1_ref, w2t_ref, b2_ref, o_ref, xp_ref,
               *, n_feature, compute_dtype):
    # Lane-pad the input block in VMEM instead of pre-padding x in HBM.
    # Zeroing the whole (tm, Fp) scratch every step is a tiny VPU op and keeps
    # the padded feature lanes exactly zero on every core (safe under megacore
    # sharding of the "parallel" batch axis).
    xp_ref[...] = jnp.zeros_like(xp_ref)
    xp_ref[:, :n_feature] = x_ref[...]          # masked store of the real lanes

    # hidden = relu(x @ W1^T + b1); weights arrive pre-transposed + pre-cast,
    # so the MXU consumes bf16 (in, out)-layout tiles directly, f32 accumulation.
    xb = xp_ref[...].astype(compute_dtype)
    h = jnp.dot(xb, w1t_ref[...], preferred_element_type=jnp.float32)
    h = jnp.maximum(h + b1_ref[...], 0.0)       # (1, Hp) bias broadcasts over rows

    # predict = hidden @ W2^T + b2
    y = jnp.dot(h.astype(compute_dtype), w2t_ref[...],
                preferred_element_type=jnp.float32)
    o_ref[...] = (y + b2_ref[...]).astype(o_ref.dtype)


def prepare_params(w1, b1, w2, b2, *, compute_dtype=jnp.bfloat16):
    """One-time (per-parameter-set) repacking: transpose + lane-pad + cast.

    PyTorch layout in:  W1 (n_hidden, n_feature), b1 (n_hidden,),
                        W2 (n_output, n_hidden), b2 (n_output,)
    Packed layout out:  W1^T (Fp, Hp) bf16, b1 (1, Hp) f32,
                        W2^T (Hp, Op) bf16, b2 (1, Op) f32

    INVARIANT the kernel relies on: all padded rows/columns of W1^T / W2^T and
    all padded bias entries are exactly zero, so padded feature/hidden/output
    lanes contribute 0 to the result.
    """
    n_hidden, n_feature = w1.shape
    n_output = w2.shape[0]
    Fp = _round_up(n_feature, LANE)
    Hp = _round_up(n_hidden, LANE)
    Op = _round_up(n_output, LANE)

    w1t = jnp.zeros((Fp, Hp), compute_dtype).at[:n_feature, :n_hidden].set(
        w1.T.astype(compute_dtype))
    b1p = jnp.zeros((1, Hp), jnp.float32).at[0, :n_hidden].set(
        b1.astype(jnp.float32))
    w2t = jnp.zeros((Hp, Op), compute_dtype).at[:n_hidden, :n_output].set(
        w2.T.astype(compute_dtype))
    b2p = jnp.zeros((1, Op), jnp.float32).at[0, :n_output].set(
        b2.astype(jnp.float32))

    return (w1t, b1p, w2t, b2p), (n_feature, n_hidden, n_output)


def net_forward(x, packed_params, dims, *, tm_max=1024):
    """Forward pass. x: (batch, n_feature) float32. Returns (batch, n_output) f32."""
    w1t, b1p, w2t, b2p = packed_params
    n_feature, n_hidden, n_output = dims
    compute_dtype = w1t.dtype
    batch = x.shape[0]
    Fp, Hp = w1t.shape
    Op = w2t.shape[1]

    # Batch tile: multiple of 8 sublanes; sized so the grid has >= 2 steps when
    # the batch allows it (v7x has 2 TensorCores to shard the "parallel" axis).
    tm = max(SUBLANE, min(tm_max, _round_up(pl.cdiv(batch, 2), SUBLANE)))
    # Output rows padded only to a sublane multiple (NOT to a whole tile);
    # partial edge blocks are handled by Pallas, extra rows sliced off below.
    Bp = _round_up(batch, SUBLANE)
    grid = (pl.cdiv(Bp, tm),)

    w_bytes = jnp.dtype(compute_dtype).itemsize
    flops = 2 * batch * (Fp * Hp + Hp * Op)
    bytes_accessed = (batch * n_feature * 4          # x (read once, unpadded)
                      + (Fp * Hp + Hp * Op) * w_bytes  # resident weights
                      + (Hp + Op) * 4                  # biases
                      + Bp * Op * 4)                   # output slab
    cost = pl.CostEstimate(flops=flops, transcendentals=0,
                           bytes_accessed=bytes_accessed)

    # Actual VMEM working set (double-buffered x/out tiles, resident params,
    # padded-x scratch) plus headroom — a few MiB, well under v7x's 64 MiB/TC.
    vmem_bytes = (2 * tm * n_feature * 4
                  + 2 * (Fp * Hp + Hp * Op) * w_bytes
                  + 2 * (Hp + Op) * 4
                  + 2 * tm * Op * 4
                  + tm * Fp * 4)
    vmem_limit = int(min(max(2 * vmem_bytes, 4 << 20), 32 << 20))

    kernel = functools.partial(mlp_kernel, n_feature=n_feature,
                               compute_dtype=compute_dtype)

    out = pl.pallas_call(
        kernel,
        out_shape=jax.ShapeDtypeStruct((Bp, Op), jnp.float32),
        grid=grid,
        in_specs=[
            pl.BlockSpec((tm, n_feature), lambda i: (i, 0)),  # x: batch-tiled, unpadded
            pl.BlockSpec((Fp, Hp), lambda i: (0, 0)),         # W1^T: resident
            pl.BlockSpec((1, Hp), lambda i: (0, 0)),          # b1: resident
            pl.BlockSpec((Hp, Op), lambda i: (0, 0)),         # W2^T: resident
            pl.BlockSpec((1, Op), lambda i: (0, 0)),          # b2: resident
        ],
        out_specs=pl.BlockSpec((tm, Op), lambda i: (i, 0)),   # lane-dense output slab
        scratch_shapes=[pltpu.VMEM((tm, Fp), jnp.float32)],   # lane-padded x staging
        compiler_params=pltpu.CompilerParams(
            dimension_semantics=("parallel",),                # v7x: split batch over 2 TCs
            vmem_limit_bytes=vmem_limit,
        ),
        cost_estimate=cost,
    )(x, w1t, b1p, w2t, b2p)

    # Slice away batch / output padding outside the kernel.
    return out[:batch, :n_output]


def init_params(key, n_feature, n_hidden, n_output):
    # Deterministic init mimicking torch.nn.Linear default: U(-1/sqrt(fan_in), 1/sqrt(fan_in))
    k1, k2, k3, k4 = jax.random.split(key, 4)
    bound1 = 1.0 / (n_feature ** 0.5)
    bound2 = 1.0 / (n_hidden ** 0.5)
    w1 = jax.random.uniform(k1, (n_hidden, n_feature), jnp.float32, -bound1, bound1)
    b1 = jax.random.uniform(k2, (n_hidden,), jnp.float32, -bound1, bound1)
    w2 = jax.random.uniform(k3, (n_output, n_hidden), jnp.float32, -bound2, bound2)
    b2 = jax.random.uniform(k4, (n_output,), jnp.float32, -bound2, bound2)
    return w1, b1, w2, b2


if __name__ == "__main__":
    key = jax.random.PRNGKey(0)
    kx, kp = jax.random.split(key)

    batch, n_feature, n_hidden, n_output = 8, 4, 32, 1
    x = jax.random.normal(kx, (batch, n_feature), jnp.float32)
    w1, b1, w2, b2 = init_params(kp, n_feature, n_hidden, n_output)

    # One-time packing (transpose + lane-pad + bf16 cast), then run the kernel.
    packed, dims = prepare_params(w1, b1, w2, b2)
    y = net_forward(x, packed, dims)
    jax.block_until_ready(y)
    assert y.shape == (batch, n_output)

    # Tight check: plain-JAX reference using the SAME bf16 quantization of
    # x / W1 / W2 and f32 accumulation (validates padding/tiling/bias/relu).
    q = lambda a: a.astype(jnp.bfloat16).astype(jnp.float32)
    h_q = jnp.maximum(q(x) @ q(w1).T + b1, 0.0)
    y_q = q(h_q) @ q(w2).T + b2
    assert jnp.allclose(y, y_q, atol=5e-3, rtol=5e-3), "mismatch vs quantized reference"

    # Loose check vs. the full-f32 PyTorch-equivalent forward (bf16 weight error only).
    h_ref = jnp.maximum(x @ w1.T + b1, 0.0)
    y_ref = h_ref @ w2.T + b2
    assert jnp.allclose(y, y_ref, atol=1e-1, rtol=1e-1), "diverges from f32 reference"

    print("KERNEL_OK")
</pallas_src>

<mosaic_0001>
module attributes {stable_mosaic.version = 11 : i64} {
  func.func @mlp_kernel(%arg0: i32, %arg1: memref<8x4xf32, #tpu.memory_space<vmem>>, %arg2: memref<128x128xbf16, #tpu.memory_space<vmem>>, %arg3: memref<1x128xf32, #tpu.memory_space<vmem>>, %arg4: memref<128x128xbf16, #tpu.memory_space<vmem>>, %arg5: memref<1x128xf32, #tpu.memory_space<vmem>>, %arg6: memref<8x128xf32, #tpu.memory_space<vmem>>, %arg7: memref<8x128xf32, #tpu.memory_space<vmem>>) attributes {dimension_semantics = [#tpu.dimension_semantics<parallel>], iteration_bounds = array<i64: 1>, scalar_prefetch = 0 : i64, scratch_operands = 1 : i64, tpu.core_type = #tpu.core_type<tc>, window_params = [{transform_indices = @transform_0, window_bounds = array<i64: 8, 4>}, {pipeline_mode = #tpu.pipeline_mode<synchronous>, transform_indices = @transform_1, window_bounds = array<i64: 128, 128>}, {pipeline_mode = #tpu.pipeline_mode<synchronous>, transform_indices = @transform_2, window_bounds = array<i64: 1, 128>}, {pipeline_mode = #tpu.pipeline_mode<synchronous>, transform_indices = @transform_3, window_bounds = array<i64: 128, 128>}, {pipeline_mode = #tpu.pipeline_mode<synchronous>, transform_indices = @transform_4, window_bounds = array<i64: 1, 128>}, {transform_indices = @transform_5, window_bounds = array<i64: 8, 128>}]} {
    %cst = arith.constant 0.000000e+00 : f32
    %0 = vector.broadcast %cst : f32 to vector<8x128xf32>
    %c0 = arith.constant 0 : index
    %c0_0 = arith.constant 0 : index
    %1 = vector.load %arg7[%c0, %c0_0] : memref<8x128xf32, #tpu.memory_space<vmem>>, vector<8x128xf32>
    tpu.vector_store %arg7[%c0, %c0_0], %0 {strides = array<i32>} : memref<8x128xf32, #tpu.memory_space<vmem>>, vector<8x128xf32>,
    %c0_1 = arith.constant 0 : index
    %c0_2 = arith.constant 0 : index
    %2 = vector.load %arg1[%c0_1, %c0_2] : memref<8x4xf32, #tpu.memory_space<vmem>>, vector<8x4xf32>
    %c0_3 = arith.constant 0 : index
    %c0_4 = arith.constant 0 : index
    %3 = vector.load %arg7[%c0_3, %c0_4] : memref<8x128xf32, #tpu.memory_space<vmem>>, vector<8x4xf32>
    tpu.vector_store %arg7[%c0_3, %c0_4], %2 {strides = array<i32>} : memref<8x128xf32, #tpu.memory_space<vmem>>, vector<8x4xf32>,
    %c0_5 = arith.constant 0 : index
    %c0_6 = arith.constant 0 : index
    %4 = vector.load %arg7[%c0_5, %c0_6] : memref<8x128xf32, #tpu.memory_space<vmem>>, vector<8x128xf32>
    %5 = arith.truncf %4 : vector<8x128xf32> to vector<8x128xbf16>
    %c0_7 = arith.constant 0 : index
    %c0_8 = arith.constant 0 : index
    %6 = vector.load %arg2[%c0_7, %c0_8] : memref<128x128xbf16, #tpu.memory_space<vmem>>, vector<128x128xbf16>
    %cst_9 = arith.constant dense<0.000000e+00> : vector<8x128xf32>
    %7 = tpu.matmul %5, %6, %cst_9 {dimension_numbers = #tpu.dot_dimension_numbers<[1], [0], [0], [1], [0, 0, 1, 1], [], []>} : vector<8x128xbf16>, vector<128x128xbf16>, vector<8x128xf32> -> vector<8x128xf32>
    %c0_10 = arith.constant 0 : index
    %c0_11 = arith.constant 0 : index
    %8 = vector.load %arg3[%c0_10, %c0_11] : memref<1x128xf32, #tpu.memory_space<vmem>>, vector<1x128xf32>
    %9 = vector.broadcast %8 : vector<1x128xf32> to vector<8x128xf32>
    %10 = arith.addf %7, %9 : vector<8x128xf32>
    %cst_12 = arith.constant 0.000000e+00 : f32
    %11 = vector.broadcast %cst_12 : f32 to vector<8x128xf32>
    %12 = arith.maximumf %10, %11 : vector<8x128xf32>
    %13 = arith.truncf %12 : vector<8x128xf32> to vector<8x128xbf16>
    %c0_13 = arith.constant 0 : index
    %c0_14 = arith.constant 0 : index
    %14 = vector.load %arg4[%c0_13, %c0_14] : memref<128x128xbf16, #tpu.memory_space<vmem>>, vector<128x128xbf16>
    %cst_15 = arith.constant dense<0.000000e+00> : vector<8x128xf32>
    %15 = tpu.matmul %13, %14, %cst_15 {dimension_numbers = #tpu.dot_dimension_numbers<[1], [0], [0], [1], [0, 0, 1, 1], [], []>} : vector<8x128xbf16>, vector<128x128xbf16>, vector<8x128xf32> -> vector<8x128xf32>
    %c0_16 = arith.constant 0 : index
    %c0_17 = arith.constant 0 : index
    %16 = vector.load %arg5[%c0_16, %c0_17] : memref<1x128xf32, #tpu.memory_space<vmem>>, vector<1x128xf32>
    %17 = vector.broadcast %16 : vector<1x128xf32> to vector<8x128xf32>
    %18 = arith.addf %15, %17 : vector<8x128xf32>
    %c0_18 = arith.constant 0 : index
    %c0_19 = arith.constant 0 : index
    %19 = vector.load %arg6[%c0_18, %c0_19] : memref<8x128xf32, #tpu.memory_space<vmem>>, vector<8x128xf32>
    tpu.vector_store %arg6[%c0_18, %c0_19], %18 {strides = array<i32>} : memref<8x128xf32, #tpu.memory_space<vmem>>, vector<8x128xf32>,
    return
  }
  func.func @transform_0(%arg0: i32) -> (i32, i32) {
    %c0_i32 = arith.constant 0 : i32
    %c0_i32_0 = arith.constant 0 : i32
    return %arg0, %c0_i32 : i32, i32
  }
  func.func @transform_1(%arg0: i32) -> (i32, i32) {
    %c0_i32 = arith.constant 0 : i32
    %c0_i32_0 = arith.constant 0 : i32
    %c0_i32_1 = arith.constant 0 : i32
    return %c0_i32, %c0_i32_0 : i32, i32
  }
  func.func @transform_2(%arg0: i32) -> (i32, i32) {
    %c0_i32 = arith.constant 0 : i32
    %c0_i32_0 = arith.constant 0 : i32
    %c0_i32_1 = arith.constant 0 : i32
    return %c0_i32, %c0_i32_0 : i32, i32
  }
  func.func @transform_3(%arg0: i32) -> (i32, i32) {
    %c0_i32 = arith.constant 0 : i32
    %c0_i32_0 = arith.constant 0 : i32
    %c0_i32_1 = arith.constant 0 : i32
    return %c0_i32, %c0_i32_0 : i32, i32
  }
  func.func @transform_4(%arg0: i32) -> (i32, i32) {
    %c0_i32 = arith.constant 0 : i32
    %c0_i32_0 = arith.constant 0 : i32
    %c0_i32_1 = arith.constant 0 : i32
    return %c0_i32, %c0_i32_0 : i32, i32
  }
  func.func @transform_5(%arg0: i32) -> (i32, i32) {
    %c0_i32 = arith.constant 0 : i32
    %c0_i32_0 = arith.constant 0 : i32
    return %arg0, %c0_i32 : i32, i32
  }
}

</mosaic_0001>

<llo_original>
// kernel: tpu_custom_call.1
$region0: #{tpu_custom_call.1}
  #allocation0 [shape = 'u32[]', space=smem, size = 0x4, offset = 0x4, fixed_abs, tag = 'smem constant byte address 0x4 - core index']
  #allocation1 [shape = 'u32[144,128]{1,0:T(1,128)}', space=vmem, size = 0x12000, scoped, tag = 'internal scratch']
  #allocation2 [shape = 'f32[8,128]{1,0:T(8,128)}', space=vmem, size = 0x1000, scoped, tag = 'scratch operand']
  %s0 = inlined_call_operand.vmem [shape: f32[8,4], index: 0, kind: input, shape index: {}]
  %s1 = inlined_call_operand.hbm [shape: bf16[128,128], index: 1, kind: input, shape index: {}]
  %s2 = inlined_call_operand.vmem [shape: f32[1,128], index: 2, kind: input, shape index: {}]
  %s3 = inlined_call_operand.hbm [shape: bf16[128,128], index: 3, kind: input, shape index: {}]
  %s4 = inlined_call_operand.vmem [shape: f32[1,128], index: 4, kind: input, shape index: {}]
  %s5 = inlined_call_operand.hbm [shape: f32[8,128], index: 5, kind: output, shape index: {}]
  %s6 = sld [smem:[#allocation0]]
  $region38: #{tpu_custom_call.1} parent=0
    _
  %s8 = ssub.s32 1, %s6
  %s9 = scalar_select 0, %s8, %s6
  $region1: #{tpu_custom_call.1} parent=0
    #allocation3 [shape = 'u8[32768]{0}', space=vmem, size = 0x8000, scoped, tag = 'input window, operand 1, single buffered']
    #allocation4 [shape = 's32[1]{0}', space=sflag, size = 0x4, scoped, tag = 'scoped memory for tpu_custom_call.1']
    #allocation5 [shape = 's32[1]{0}', space=sflag, size = 0x4, scoped, tag = 'scoped memory for tpu_custom_call.1']
    #allocation6 [shape = 'u8[32768]{0}', space=vmem, size = 0x8000, scoped, tag = 'input window, operand 3, single buffered']
    #allocation7 [shape = 's32[1]{0}', space=sflag, size = 0x4, scoped, tag = 'scoped memory for tpu_custom_call.1']
    #allocation8 [shape = 'u8[4096]{0}', space=vmem, size = 0x1000, scoped, tag = 'output window, operand 0, single buffered']
    %10 = vsyncpa [#allocation4], 0
    %11 = vsyncpa [#allocation7], 0
    %12 = vsyncpa [#allocation5], 0
    // Predicated region
    $region2: #{tpu_custom_call.1} parent=1 // pred_check
      _
    $region3: #{tpu_custom_call.1} parent=1 // pred_check_branch
      %14 = sbr.rel (0) target = $region5
    $region4: #{tpu_custom_call.1} parent=1 // pred_region
      _
    $region5: #{tpu_custom_call.1} parent=1 // pred_fallthru
      _
    // Predicated region
    $region6: #{tpu_custom_call.1} parent=1 // pred_check
      _
    $region7: #{tpu_custom_call.1} parent=1 // pred_check_branch
      %16 = sbr.rel (0) target = $region9
    $region8: #{tpu_custom_call.1} parent=1 // pred_region
      %s18 = ssub.s32 1024, 1024
      %19 = vsyncadd [#allocation4], %s18
      %s20 = sshll.u32 [#allocation3], 4
      %s21 = int_to_ptr.vmem [resolvable:$true] %s20
      %26 = dma.hbm_to_vmem [thread:$0]  %s1, 1024, %s21, [#allocation4], 64, 64, 4
    $region9: #{tpu_custom_call.1} parent=1 // pred_fallthru
      _
    // Predicated region
    $region10: #{tpu_custom_call.1} parent=1 // pred_check
      _
    $region11: #{tpu_custom_call.1} parent=1 // pred_check_branch
      %28 = sbr.rel (0) target = $region13
    $region12: #{tpu_custom_call.1} parent=1 // pred_region
      _
    $region13: #{tpu_custom_call.1} parent=1 // pred_fallthru
      _
    // Predicated region
    $region14: #{tpu_custom_call.1} parent=1 // pred_check
      _
    $region15: #{tpu_custom_call.1} parent=1 // pred_check_branch
      %30 = sbr.rel (0) target = $region17
    $region16: #{tpu_custom_call.1} parent=1 // pred_region
      %s32 = ssub.s32 1024, 1024
      %33 = vsyncadd [#allocation7], %s32
      %s34 = sshll.u32 [#allocation6], 4
      %s35 = int_to_ptr.vmem [resolvable:$true] %s34
      %40 = dma.hbm_to_vmem [thread:$0]  %s3, 1024, %s35, [#allocation7], 64, 64, 4
    $region17: #{tpu_custom_call.1} parent=1 // pred_fallthru
      _
    // Predicated region
    $region18: #{tpu_custom_call.1} parent=1 // pred_check
      _
    $region19: #{tpu_custom_call.1} parent=1 // pred_check_branch
      %42 = sbr.rel (0) target = $region21
    $region20: #{tpu_custom_call.1} parent=1 // pred_region
      _
    $region21: #{tpu_custom_call.1} parent=1 // pred_fallthru
      _
    // Predicated region
    $region22: #{tpu_custom_call.1} parent=1 // pred_check
      _
    $region23: #{tpu_custom_call.1} parent=1 // pred_check_branch
      %44 = sbr.rel (0) target = $region25
    $region24: #{tpu_custom_call.1} parent=1 // pred_region
      %45 = dma.done [#allocation4], 1024
    $region25: #{tpu_custom_call.1} parent=1 // pred_fallthru
      _
    // Predicated region
    $region26: #{tpu_custom_call.1} parent=1 // pred_check
      _
    $region27: #{tpu_custom_call.1} parent=1 // pred_check_branch
      %47 = sbr.rel (0) target = $region29
    $region28: #{tpu_custom_call.1} parent=1 // pred_region
      %48 = dma.done [#allocation7], 1024
    $region29: #{tpu_custom_call.1} parent=1 // pred_fallthru
      _
    %50 = vst [vmem:[#allocation2] sm:$0xff] 0.0
    %v51 = vld [vmem:[%s0] sm:$0xff]
    %vm52 = vcmask 31744
    %53 = vst.msk [vmem:[#allocation2] sm:$0xff] %vm52, %v51
    %v54 = vld [vmem:[#allocation2] sm:$0xff]
    %v55 = vpack.c.bf16 %v54, %v54
    %v56 = vld [vmem:[#allocation3] sm:$0xf]
    %v57 = vld [vmem:[#allocation3 + $0x4] sm:$0xf]
    %v58 = vld [vmem:[#allocation3 + $0x8] sm:$0xf]
    %v59 = vld [vmem:[#allocation3 + $0xc] sm:$0xf]
    %v60 = vld [vmem:[#allocation3 + $0x10] sm:$0xf]
    %v61 = vld [vmem:[#allocation3 + $0x14] sm:$0xf]
    %v62 = vld [vmem:[#allocation3 + $0x18] sm:$0xf]
    %v63 = vld [vmem:[#allocation3 + $0x1c] sm:$0xf]
    %v64 = vld [vmem:[#allocation3 + $0x20] sm:$0xf]
    %v65 = vld [vmem:[#allocation3 + $0x24] sm:$0xf]
    %v66 = vld [vmem:[#allocation3 + $0x28] sm:$0xf]
    %v67 = vld [vmem:[#allocation3 + $0x2c] sm:$0xf]
    %v68 = vld [vmem:[#allocation3 + $0x30] sm:$0xf]
    %v69 = vld [vmem:[#allocation3 + $0x34] sm:$0xf]
    %v70 = vld [vmem:[#allocation3 + $0x38] sm:$0xf]
    %v71 = vld [vmem:[#allocation3 + $0x3c] sm:$0xf]
    %v72 = vld [vmem:[%s2] sm:$0x1]
    %v74 = vlaneseq
    %v75 = vshrl.u32 %v74, 7
    %v76 = vsub.s32 0, %v75
    %v77 = vrot.slane %v72, %v76
    %v95 = vunpack.c.l.b16 %v56
    %v96 = vunpack.c.l.b16 %v57
    %v97 = vunpack.c.l.b16 %v58
    %v98 = vunpack.c.l.b16 %v59
    %v99 = vunpack.c.l.b16 %v60
    %v100 = vunpack.c.l.b16 %v61
    %v101 = vunpack.c.l.b16 %v62
    %v102 = vunpack.c.l.b16 %v63
    %v103 = vunpack.c.l.b16 %v64
    %v104 = vunpack.c.l.b16 %v65
    %v105 = vunpack.c.l.b16 %v66
    %v106 = vunpack.c.l.b16 %v67
    %v107 = vunpack.c.l.b16 %v68
    %v108 = vunpack.c.l.b16 %v69
    %v109 = vunpack.c.l.b16 %v70
    %v110 = vunpack.c.l.b16 %v71
    %v111 = vpack.c.b16 %v96, %v95
    %v112 = vpack.c.b16 %v98, %v97
    %v113 = vpack.c.b16 %v100, %v99
    %v114 = vpack.c.b16 %v102, %v101
    %v115 = vpack.c.b16 %v104, %v103
    %v116 = vpack.c.b16 %v106, %v105
    %v117 = vpack.c.b16 %v108, %v107
    %v118 = vpack.c.b16 %v110, %v109
    %127 = vmatprep.subr.bf16.mxu0 0
    %128 = vmatpush1.bf16.msra.mxu0 %v111
    %129 = vmatprep.subr.bf16.mxu0 0
    %130 = vmatpush1.bf16.msra.mxu0 %v112
    %131 = vmatprep.subr.bf16.mxu0 0
    %132 = vmatpush1.bf16.msra.mxu0 %v113
    %133 = vmatprep.subr.bf16.mxu0 0
    %134 = vmatpush1.bf16.msra.mxu0 %v114
    %135 = vmatprep.subr.bf16.mxu0 0
    %136 = vmatpush1.bf16.msra.mxu0 %v115
    %137 = vmatprep.subr.bf16.mxu0 0
    %138 = vmatpush1.bf16.msra.mxu0 %v116
    %139 = vmatprep.subr.bf16.mxu0 0
    %140 = vmatpush1.bf16.msra.mxu0 %v117
    %141 = vmatprep.subr.bf16.mxu0 0
    %142 = vmatpush1.bf16.msra.mxu0 %v118
    %143 = vmatprep.subr.bf16.mxu0 0
    %144 = vmatpush1.bf16.msra.mxu0 0
    %145 = vmatprep.subr.bf16.mxu0 0
    %146 = vmatpush1.bf16.msra.mxu0 0
    %147 = vmatprep.subr.bf16.mxu0 0
    %148 = vmatpush1.bf16.msra.mxu0 0
    %149 = vmatprep.subr.bf16.mxu0 0
    %150 = vmatpush1.bf16.msra.mxu0 0
    %151 = vmatprep.subr.bf16.mxu0 0
    %152 = vmatpush1.bf16.msra.mxu0 0
    %153 = vmatprep.subr.bf16.mxu0 0
    %154 = vmatpush1.bf16.msra.mxu0 0
    %155 = vmatprep.subr.bf16.mxu0 0
    %156 = vmatpush1.bf16.msra.mxu0 0
    %157 = vmatprep.subr.bf16.mxu0 0
    %158 = vmatpush1.bf16.msra.mxu0 0
    %159 = vmatprep.mubr.bf16.mxu0 0
    %160 = vmatmul.mubr.bf16.gmra.mrb[0].mxu0 %v55
    %v161 = vpop.f32.mrb[0].mxu0
    %v162 = vadd.f32 %v77, %v161
    %v163 = vpop.f32.mrb[0].mxu0
    %v164 = vpop.f32.mrb[0].mxu0
    %v165 = vpop.f32.mrb[0].mxu0
    %166 = vdwg.mxu0
    %v167 = vmax.f32 %v162, 0.0
    %v168 = vpack.c.bf16 %v167, %v167
    %v169 = vld [vmem:[#allocation6] sm:$0xf]
    %v170 = vld [vmem:[#allocation6 + $0x4] sm:$0xf]
    %v171 = vld [vmem:[#allocation6 + $0x8] sm:$0xf]
    %v172 = vld [vmem:[#allocation6 + $0xc] sm:$0xf]
    %v173 = vld [vmem:[#allocation6 + $0x10] sm:$0xf]
    %v174 = vld [vmem:[#allocation6 + $0x14] sm:$0xf]
    %v175 = vld [vmem:[#allocation6 + $0x18] sm:$0xf]
    %v176 = vld [vmem:[#allocation6 + $0x1c] sm:$0xf]
    %v177 = vld [vmem:[#allocation6 + $0x20] sm:$0xf]
    %v178 = vld [vmem:[#allocation6 + $0x24] sm:$0xf]
    %v179 = vld [vmem:[#allocation6 + $0x28] sm:$0xf]
    %v180 = vld [vmem:[#allocation6 + $0x2c] sm:$0xf]
    %v181 = vld [vmem:[#allocation6 + $0x30] sm:$0xf]
    %v182 = vld [vmem:[#allocation6 + $0x34] sm:$0xf]
    %v183 = vld [vmem:[#allocation6 + $0x38] sm:$0xf]
    %v184 = vld [vmem:[#allocation6 + $0x3c] sm:$0xf]
    %v185 = vld [vmem:[%s4] sm:$0x1]
    %v187 = vlaneseq
    %v188 = vshrl.u32 %v187, 7
    %v189 = vsub.s32 0, %v188
    %v190 = vrot.slane %v185, %v189
    %v208 = vunpack.c.l.b16 %v169
    %v209 = vunpack.c.l.b16 %v170
    %v210 = vunpack.c.l.b16 %v171
    %v211 = vunpack.c.l.b16 %v172
    %v212 = vunpack.c.l.b16 %v173
    %v213 = vunpack.c.l.b16 %v174
    %v214 = vunpack.c.l.b16 %v175
    %v215 = vunpack.c.l.b16 %v176
    %v216 = vunpack.c.l.b16 %v177
    %v217 = vunpack.c.l.b16 %v178
    %v218 = vunpack.c.l.b16 %v179
    %v219 = vunpack.c.l.b16 %v180
    %v220 = vunpack.c.l.b16 %v181
    %v221 = vunpack.c.l.b16 %v182
    %v222 = vunpack.c.l.b16 %v183
    %v223 = vunpack.c.l.b16 %v184
    %v224 = vpack.c.b16 %v209, %v208
    %v225 = vpack.c.b16 %v211, %v210
    %v226 = vpack.c.b16 %v213, %v212
    %v227 = vpack.c.b16 %v215, %v214
    %v228 = vpack.c.b16 %v217, %v216
    %v229 = vpack.c.b16 %v219, %v218
    %v230 = vpack.c.b16 %v221, %v220
    %v231 = vpack.c.b16 %v223, %v222
    %240 = vmatprep.subr.bf16.mxu0 0
    %241 = vmatpush1.bf16.msra.mxu0 %v224
    %242 = vmatprep.subr.bf16.mxu0 0
    %243 = vmatpush1.bf16.msra.mxu0 %v225
    %244 = vmatprep.subr.bf16.mxu0 0
    %245 = vmatpush1.bf16.msra.mxu0 %v226
    %246 = vmatprep.subr.bf16.mxu0 0
    %247 = vmatpush1.bf16.msra.mxu0 %v227
    %248 = vmatprep.subr.bf16.mxu0 0
    %249 = vmatpush1.bf16.msra.mxu0 %v228
    %250 = vmatprep.subr.bf16.mxu0 0
    %251 = vmatpush1.bf16.msra.mxu0 %v229
    %252 = vmatprep.subr.bf16.mxu0 0
    %253 = vmatpush1.bf16.msra.mxu0 %v230
    %254 = vmatprep.subr.bf16.mxu0 0
    %255 = vmatpush1.bf16.msra.mxu0 %v231
    %256 = vmatprep.subr.bf16.mxu0 0
    %257 = vmatpush1.bf16.msra.mxu0 0
    %258 = vmatprep.subr.bf16.mxu0 0
    %259 = vmatpush1.bf16.msra.mxu0 0
    %260 = vmatprep.subr.bf16.mxu0 0
    %261 = vmatpush1.bf16.msra.mxu0 0
    %262 = vmatprep.subr.bf16.mxu0 0
    %263 = vmatpush1.bf16.msra.mxu0 0
    %264 = vmatprep.subr.bf16.mxu0 0
    %265 = vmatpush1.bf16.msra.mxu0 0
    %266 = vmatprep.subr.bf16.mxu0 0
    %267 = vmatpush1.bf16.msra.mxu0 0
    %268 = vmatprep.subr.bf16.mxu0 0
    %269 = vmatpush1.bf16.msra.mxu0 0
    %270 = vmatprep.subr.bf16.mxu0 0
    %271 = vmatpush1.bf16.msra.mxu0 0
    %272 = vmatprep.mubr.bf16.mxu0 0
    %273 = vmatmul.mubr.bf16.gmra.mrb[0].mxu0 %v168
    %v274 = vpop.f32.mrb[0].mxu0
    %v275 = vadd.f32 %v190, %v274
    %v276 = vpop.f32.mrb[0].mxu0
    %v277 = vpop.f32.mrb[0].mxu0
    %v278 = vpop.f32.mrb[0].mxu0
    %279 = vdwg.mxu0
    %280 = vst [vmem:[#allocation8] sm:$0xff] %v275
    // Predicated region
    $region30: #{tpu_custom_call.1} parent=1 // pred_check
      _
    $region31: #{tpu_custom_call.1} parent=1 // pred_check_branch
      %282 = sbr.rel (0) target = $region33
    $region32: #{tpu_custom_call.1} parent=1 // pred_region
      %s284 = ssub.s32 128, 128
      %285 = vsyncadd [#allocation5], %s284
      %s287 = sshll.u32 [#allocation8], 4
      %s288 = int_to_ptr.vmem [resolvable:$true] %s287
      %290 = dma.vmem_to_hbm [thread:$0]  %s288, 128, %s5, [#allocation5]
    $region33: #{tpu_custom_call.1} parent=1 // pred_fallthru
      _
    // Predicated region
    $region34: #{tpu_custom_call.1} parent=1 // pred_check
      _
    $region35: #{tpu_custom_call.1} parent=1 // pred_check_branch
      %292 = sbr.rel (0) target = $region37
    $region36: #{tpu_custom_call.1} parent=1 // pred_region
      %293 = dma.done [#allocation5], 128
    $region37: #{tpu_custom_call.1} parent=1 // pred_fallthru
      _
    %294 = vsyncpa [#allocation4], 1
    %295 = vsyncpa [#allocation7], 1
    %296 = vsyncpa [#allocation5], 1

</llo_original>
